<compile_context>
chip_gen: v7x
topology: tpu7x:2x2x1
jax: 0.10.0
libtpu: 0.0.40
codegen_flags: <defaults>
</compile_context>

<pallas_src>
import functools
import math

import jax
import jax.numpy as jnp
import numpy as np
from jax import lax
from jax.experimental import pallas as pl
from jax.experimental.pallas import tpu as pltpu


# ----------------------------- tile selection -----------------------------

def _device_kind():
    try:
        return jax.devices()[0].device_kind.lower()
    except Exception:
        return ""


def _round_up(x, m):
    return ((x + m - 1) // m) * m


def _choose_tiles(N, C, E, op_bytes, out_bytes):
    """Aligned (TN, TC), padded dims, resident-W decision, vmem limit."""
    is_v7 = "v7" in _device_kind()
    # v7x: 64 MiB VMEM/TC; v5e/v6e: 128 MiB. Leave headroom for compiler scratch.
    vmem_limit = (48 << 20) if is_v7 else (100 << 20)
    budget = int(0.70 * vmem_limit)

    n_cap = _round_up(N, 8)
    if is_v7 and n_cap >= 16:
        # Keep >= 2 steps on the parallel N axis so both TensorCores get work.
        n_cap = min(n_cap, _round_up((N + 1) // 2, 8))
    c_cap = _round_up(C, 128)

    tn_opts = sorted({min(t, n_cap) for t in (1024, 512, 256, 128, 8)},
                     reverse=True)
    tc_opts = sorted({min(t, c_cap) for t in (4096, 2048, 1024, 512, 256, 128)},
                     reverse=True)

    def plan(tn, tc):
        n_pad = _round_up(N, tn)
        c_pad = _round_up(C, tc)
        w_bytes = c_pad * E * op_bytes
        # Whole normalized W resident in VMEM removes per-row-tile W
        # re-streaming; budget it at 2x (constant-index block may still be
        # double-buffered by the pipeline emitter).
        resident = 2 * w_bytes <= min(24 << 20, budget // 2)
        ops = (2 * tn * E * op_bytes + 2 * w_bytes) if resident \
            else 2 * (tn + tc) * E * op_bytes
        outs = 2 * tn * tc * out_bytes            # double-buffered logits tile
        scr = 2 * tn * 128 * 4                    # lane-dense accumulators
        return (ops + outs + scr) <= budget, resident, n_pad, c_pad

    for tn in tn_opts:                            # large TN first (fewer W streams)
        for tc in tc_opts:                        # large TC (lane-dense output)
            ok, resident, n_pad, c_pad = plan(tn, tc)
            if ok:
                return tn, tc, n_pad, c_pad, resident, vmem_limit
    tn, tc = tn_opts[-1], tc_opts[-1]
    _, resident, n_pad, c_pad = plan(tn, tc)
    return tn, tc, n_pad, c_pad, resident, vmem_limit


def _rownorm_tile(r_pad, e, budget):
    """Largest multiple-of-8 divisor of r_pad keeping ~TR*E*16B inside budget."""
    cap = min(r_pad, 1024, max(8, budget // (16 * max(e, 1))))
    cap = max(8, (cap // 8) * 8)
    t = cap
    while t >= 8:
        if r_pad % t == 0:
            return t
        t -= 8
    return 8   # r_pad is a multiple of 8 by construction


# ------------------------------ kernels -----------------------------------

def _rownorm_kernel(x_ref, o_ref):
    # F.normalize: x / max(||x||_2, 1e-12), row-wise.
    # rsqrt(max(ss, eps^2)) == 1 / max(||x||, eps); rsqrt runs on the EUP.
    x = x_ref[...].astype(jnp.float32)
    ss = jnp.sum(x * x, axis=1, keepdims=True)
    inv = lax.rsqrt(jnp.maximum(ss, 1e-24))
    o_ref[...] = (x * inv).astype(o_ref.dtype)


def _take_w(wn_ref, j, tc, w_resident):
    if w_resident:
        # Whole W is resident in VMEM; slice the current (TC, E) chunk.
        return wn_ref[pl.ds(pl.multiple_of(j * tc, 128), tc), :]
    return wn_ref[...]


def _infer_kernel(xn_ref, wn_ref, logits_ref, *, tc, w_resident):
    w = _take_w(wn_ref, pl.program_id(1), tc, w_resident)
    # (TN, E) x (TC, E) -> (TN, TC): contract E on the stored layout (no .T).
    logits_ref[...] = lax.dot_general(
        xn_ref[...], w,
        dimension_numbers=(((1,), (1,)), ((), ())),
        preferred_element_type=jnp.float32).astype(logits_ref.dtype)


def _train_kernel(s_ref, label_ref, xn_ref, wn_ref,
                  logits_ref, bsum_ref, tsum_ref,
                  bsum_acc, tsum_acc, *, tc, w_resident):
    j = pl.program_id(1)

    @pl.when(j == 0)
    def _init():
        bsum_acc[...] = jnp.zeros_like(bsum_acc)
        tsum_acc[...] = jnp.zeros_like(tsum_acc)

    w = _take_w(wn_ref, j, tc, w_resident)
    logits = lax.dot_general(
        xn_ref[...], w,
        dimension_numbers=(((1,), (1,)), ((), ())),
        preferred_element_type=jnp.float32)                 # (TN, TC) f32
    logits_ref[...] = logits.astype(logits_ref.dtype)

    s = s_ref[0]
    col = lax.broadcasted_iota(jnp.int32, logits.shape, 1) + j * tc
    is_target = col == label_ref[...]                       # (TN,1) -> (TN,TC)

    # Trimmed epilogue: exp over ALL classes (target / padded columns are
    # removed in the glue), raw target logit gathered via a single select.
    e = jnp.exp(s * logits)
    t = jnp.where(is_target, logits, 0.0)

    # Lane-dense accumulation: fold the TC/128 lane blocks with plain VPU adds
    # into (TN, 128) partials; the cross-lane XLU reduce runs once in finalize.
    tn = logits.shape[0]
    e_part = jnp.zeros((tn, 128), jnp.float32)
    t_part = jnp.zeros((tn, 128), jnp.float32)
    for k in range(tc // 128):
        sl = slice(k * 128, (k + 1) * 128)
        e_part = e_part + e[:, sl]
        t_part = t_part + t[:, sl]
    bsum_acc[...] += e_part
    tsum_acc[...] += t_part

    @pl.when(j == pl.num_programs(1) - 1)
    def _finalize():
        bsum_ref[...] = jnp.sum(bsum_acc[...], axis=1, keepdims=True)
        tsum_ref[...] = jnp.sum(tsum_acc[...], axis=1, keepdims=True)


# ------------------------------ wrappers -----------------------------------

def _row_normalize(x, out_dtype, budget, vmem_limit):
    """Row-L2-normalize a (R, E) matrix with a tiled Pallas kernel."""
    R, E = x.shape
    TR = _rownorm_tile(R, E, budget)
    return pl.pallas_call(
        _rownorm_kernel,
        out_shape=jax.ShapeDtypeStruct((R, E), out_dtype),
        grid=(R // TR,),
        in_specs=[pl.BlockSpec((TR, E), lambda i: (i, 0))],
        out_specs=pl.BlockSpec((TR, E), lambda i: (i, 0)),
        compiler_params=pltpu.CompilerParams(
            dimension_semantics=("parallel",),
            vmem_limit_bytes=vmem_limit),
    )(x)


def adacos_forward(x, weight, label=None, s_init=None, *,
                   mxu_dtype=jnp.bfloat16, logits_dtype=jnp.float32,
                   apply_scale=True):
    """Mirrors AdaCos.forward.

    label is None -> cosine logits (N, C).
    label given   -> (s_new * logits, s_new).  With apply_scale=False returns
                     (logits, s_new) so the scalar scale can be fused into the
                     downstream loss instead of an extra (N, C) HBM pass.
    NOTE: bf16 MXU operands differ from PyTorch f32 logits at ~1e-3; pass
    mxu_dtype=jnp.float32 for bit-closer parity.
    """
    x = jnp.asarray(x)
    weight = jnp.asarray(weight)
    N, E = x.shape
    C, E2 = weight.shape
    assert E == E2
    if s_init is None:
        s_init = math.sqrt(2) * math.log(C - 1)

    op_bytes = jnp.dtype(mxu_dtype).itemsize
    out_bytes = jnp.dtype(logits_dtype).itemsize
    tn, tc, n_pad, c_pad, w_resident, vmem_limit = _choose_tiles(
        N, C, E, op_bytes, out_bytes)
    budget = int(0.70 * vmem_limit)

    # Pad N / C up to a tile multiple.  Zero rows L2-normalize to zero rows,
    # so padded logits are exactly 0 (corrected for / sliced off below).
    xp = x if n_pad == N else jnp.pad(x, ((0, n_pad - N), (0, 0)))
    wp = weight if c_pad == C else jnp.pad(weight, ((0, c_pad - C), (0, 0)))

    # Normalize once (prologue), emitting MXU-dtype operands.
    xn = _row_normalize(xp, mxu_dtype, budget, vmem_limit)
    wn = _row_normalize(wp, mxu_dtype, budget, vmem_limit)

    grid = (n_pad // tn, c_pad // tc)
    if w_resident:
        wn_spec = pl.BlockSpec((c_pad, E), lambda i, j: (0, 0))
        w_stream = c_pad * E * op_bytes
    else:
        wn_spec = pl.BlockSpec((tc, E), lambda i, j: (j, 0))
        w_stream = grid[0] * c_pad * E * op_bytes     # W re-streamed per row tile

    cost = pl.CostEstimate(
        flops=2 * n_pad * c_pad * E,
        transcendentals=0 if label is None else n_pad * c_pad,
        bytes_accessed=(n_pad * E * op_bytes + w_stream
                        + n_pad * c_pad * out_bytes
                        + (0 if label is None else 12 * n_pad)),
    )

    if label is None:
        kern = functools.partial(_infer_kernel, tc=tc, w_resident=w_resident)
        logits_p = pl.pallas_call(
            kern,
            out_shape=jax.ShapeDtypeStruct((n_pad, c_pad), logits_dtype),
            grid=grid,
            in_specs=[pl.BlockSpec((tn, E), lambda i, j: (i, 0)), wn_spec],
            out_specs=pl.BlockSpec((tn, tc), lambda i, j: (i, j)),
            compiler_params=pltpu.CompilerParams(
                dimension_semantics=("parallel", "parallel"),
                vmem_limit_bytes=vmem_limit),
            cost_estimate=cost,
        )(xn, wn)
        return logits_p[:N, :C]

    # NOTE: label values are assumed to lie in [0, C) (as PyTorch's scatter_
    # requires); out-of-range labels would leave the gathered logit at 0.
    lab = jnp.reshape(label, (N, 1)).astype(jnp.int32)
    if n_pad != N:
        lab = jnp.pad(lab, ((0, n_pad - N), (0, 0)))
    s_old = jnp.reshape(jnp.asarray(s_init, jnp.float32), (1,))

    kern = functools.partial(_train_kernel, tc=tc, w_resident=w_resident)
    logits_p, bsum, tsum = pl.pallas_call(
        kern,
        out_shape=(jax.ShapeDtypeStruct((n_pad, c_pad), logits_dtype),
                   jax.ShapeDtypeStruct((n_pad, 1), jnp.float32),
                   jax.ShapeDtypeStruct((n_pad, 1), jnp.float32)),
        grid=grid,                                   # C (reduction) axis last
        in_specs=[pl.BlockSpec(memory_space=pltpu.MemorySpace.SMEM),   # s
                  pl.BlockSpec((tn, 1), lambda i, j: (i, 0)),          # label
                  pl.BlockSpec((tn, E), lambda i, j: (i, 0)),          # xn
                  wn_spec],                                            # wn
        out_specs=(pl.BlockSpec((tn, tc), lambda i, j: (i, j)),        # logits
                   pl.BlockSpec((tn, 1), lambda i, j: (i, 0)),         # sum exp
                   pl.BlockSpec((tn, 1), lambda i, j: (i, 0))),        # target
        scratch_shapes=[pltpu.VMEM((tn, 128), jnp.float32),
                        pltpu.VMEM((tn, 128), jnp.float32)],
        compiler_params=pltpu.CompilerParams(
            dimension_semantics=("parallel", "arbitrary"),
            vmem_limit_bytes=vmem_limit),
        cost_estimate=cost,
    )(s_old, lab, xn, wn)

    logits = logits_p[:N, :C]

    # ---- adaptive-s update (scalar glue) ----
    # TODO(synk): global median needs a sort; it and the scalar s update stay
    # in plain JAX (no Pallas sort primitive).
    s0 = s_old[0]
    sum_exp = bsum[:N, 0]                 # sum_c exp(s*logit), incl. target/pad
    tlogit = tsum[:N, 0]                  # raw target-class logit per row
    pad_cols = float(c_pad - C)           # padded columns have logit == 0 exactly
    brow = sum_exp - jnp.exp(s0 * tlogit) - pad_cols     # non-target classes only
    B_avg = jnp.sum(brow) / N
    theta_t = jnp.arccos(jnp.clip(tlogit, -1.0 + 1e-07, 1.0 - 1e-07))
    theta_med = jnp.sort(theta_t)[(N - 1) // 2]          # torch lower median
    s_new = jnp.log(B_avg) / jnp.cos(jnp.minimum(math.pi / 4, theta_med))

    if not apply_scale:
        return logits, s_new
    # Final scale is a pure HBM-bound scalar multiply; prefer apply_scale=False
    # and fuse it into the downstream loss when possible.
    return s_new * logits, s_new


def make_adacos_weight(key, num_classes, embedding_size):
    # nn.init.xavier_uniform_ on (num_classes, embedding_size):
    # bound = sqrt(6 / (fan_in + fan_out))
    bound = math.sqrt(6.0 / (embedding_size + num_classes))
    return jax.random.uniform(key, (num_classes, embedding_size),
                              minval=-bound, maxval=bound, dtype=jnp.float32)


if __name__ == "__main__":
    num_classes = 10
    embedding_size = 32
    batch = 8

    key = jax.random.PRNGKey(0)
    k_w, k_x, k_l = jax.random.split(key, 3)

    weight = make_adacos_weight(k_w, num_classes, embedding_size)
    x = jax.random.normal(k_x, (batch, embedding_size), dtype=jnp.float32)
    label = jax.random.randint(k_l, (batch,), 0, num_classes, dtype=jnp.int32)

    # label=None path: plain cosine logits (matmul-only kernel).
    logits = adacos_forward(x, weight, label=None)
    # label path: adaptive-s scaled logits.
    out, s_new = adacos_forward(x, weight, label=label)
    jax.block_until_ready((logits, out, s_new))

    # Sanity check against a plain-JAX reference (loose tolerance: bf16 MXU
    # operands vs. f32 reference).
    def _norm(v):
        return v / jnp.maximum(jnp.linalg.norm(v, axis=1, keepdims=True), 1e-12)

    ref_logits = jnp.matmul(_norm(x), _norm(weight).T,
                            precision=jax.lax.Precision.HIGHEST)
    s0 = math.sqrt(2) * math.log(num_classes - 1)
    theta = jnp.arccos(jnp.clip(ref_logits, -1.0 + 1e-07, 1.0 - 1e-07))
    one_hot = jax.nn.one_hot(label, num_classes)
    ref_B = jnp.sum(jnp.where(one_hot < 1, jnp.exp(s0 * ref_logits), 0.0)) / batch
    theta_t = theta[jnp.arange(batch), label]
    theta_med = jnp.sort(theta_t)[(batch - 1) // 2]
    ref_s = jnp.log(ref_B) / jnp.cos(jnp.minimum(math.pi / 4, theta_med))
    ref_out = ref_s * ref_logits

    np.testing.assert_allclose(np.asarray(logits), np.asarray(ref_logits),
                               rtol=3e-2, atol=3e-2)
    np.testing.assert_allclose(np.asarray(out), np.asarray(ref_out),
                               rtol=3e-2, atol=3e-2)
    np.testing.assert_allclose(float(s_new), float(ref_s), rtol=3e-2, atol=3e-2)

    print("KERNEL_OK")
</pallas_src>

<mosaic_0001>
module attributes {stable_mosaic.version = 11 : i64} {
  func.func @_rownorm_kernel(%arg0: i32, %arg1: memref<8x32xf32, #tpu.memory_space<vmem>>, %arg2: memref<8x32xbf16, #tpu.memory_space<vmem>>) attributes {dimension_semantics = [#tpu.dimension_semantics<parallel>], iteration_bounds = array<i64: 1>, scalar_prefetch = 0 : i64, scratch_operands = 0 : i64, tpu.core_type = #tpu.core_type<tc>, window_params = [{transform_indices = @transform_0, window_bounds = array<i64: 8, 32>}, {transform_indices = @transform_1, window_bounds = array<i64: 8, 32>}]} {
    %c0 = arith.constant 0 : index
    %c0_0 = arith.constant 0 : index
    %0 = vector.load %arg1[%c0, %c0_0] : memref<8x32xf32, #tpu.memory_space<vmem>>, vector<8x32xf32>
    %1 = arith.mulf %0, %0 : vector<8x32xf32>
    %cst = arith.constant dense<0.000000e+00> : vector<8xf32>
    %2 = vector.multi_reduction <add>, %1, %cst [1] : vector<8x32xf32> to vector<8xf32>
    %3 = vector.shape_cast %2 : vector<8xf32> to vector<8x1xf32>
    %cst_1 = arith.constant 1.000000e-24 : f32
    %4 = vector.broadcast %cst_1 : f32 to vector<8x1xf32>
    %5 = arith.maximumf %3, %4 : vector<8x1xf32>
    %6 = math.rsqrt %5 : vector<8x1xf32>
    %7 = vector.broadcast %6 : vector<8x1xf32> to vector<8x32xf32>
    %8 = arith.mulf %0, %7 : vector<8x32xf32>
    %9 = arith.truncf %8 : vector<8x32xf32> to vector<8x32xbf16>
    %c0_2 = arith.constant 0 : index
    %c0_3 = arith.constant 0 : index
    %10 = vector.load %arg2[%c0_2, %c0_3] : memref<8x32xbf16, #tpu.memory_space<vmem>>, vector<8x32xbf16>
    tpu.vector_store %arg2[%c0_2, %c0_3], %9 {strides = array<i32>} : memref<8x32xbf16, #tpu.memory_space<vmem>>, vector<8x32xbf16>,
    return
  }
  func.func @transform_0(%arg0: i32) -> (i32, i32) {
    %c0_i32 = arith.constant 0 : i32
    %c0_i32_0 = arith.constant 0 : i32
    return %arg0, %c0_i32 : i32, i32
  }
  func.func @transform_1(%arg0: i32) -> (i32, i32) {
    %c0_i32 = arith.constant 0 : i32
    %c0_i32_0 = arith.constant 0 : i32
    return %arg0, %c0_i32 : i32, i32
  }
}

</mosaic_0001>

<llo_original>
// kernel: tpu_custom_call.1
$region0: #{tpu_custom_call.1}
  #allocation0 [shape = 'u32[]', space=smem, size = 0x4, offset = 0x4, fixed_abs, tag = 'smem constant byte address 0x4 - core index']
  #allocation1 [shape = 'u32[144,128]{1,0:T(1,128)}', space=vmem, size = 0x12000, scoped, tag = 'internal scratch']
  %s0 = inlined_call_operand.hbm [shape: f32[8,32], index: 0, kind: input, shape index: {}]
  %s1 = inlined_call_operand.hbm [shape: bf16[8,32], index: 1, kind: output, shape index: {}]
  %s2 = sld [smem:[#allocation0]]
  $region18: #{tpu_custom_call.1} parent=0
    _
  %s4 = ssub.s32 1, %s2
  %s5 = scalar_select 0, %s4, %s2
  $region1: #{tpu_custom_call.1} parent=0
    #allocation2 [shape = 'u8[4096]{0}', space=vmem, size = 0x1000, scoped, tag = 'input window, operand 0, single buffered']
    #allocation3 [shape = 's32[1]{0}', space=sflag, size = 0x4, scoped, tag = 'scoped memory for tpu_custom_call.1']
    #allocation4 [shape = 's32[1]{0}', space=sflag, size = 0x4, scoped, tag = 'scoped memory for tpu_custom_call.1']
    #allocation5 [shape = 'u8[2048]{0}', space=vmem, size = 0x800, scoped, tag = 'output window, operand 0, single buffered']
    %6 = vsyncpa [#allocation3], 0
    %7 = vsyncpa [#allocation4], 0
    // Predicated region
    $region2: #{tpu_custom_call.1} parent=1 // pred_check
      _
    $region3: #{tpu_custom_call.1} parent=1 // pred_check_branch
      %9 = sbr.rel (0) target = $region5
    $region4: #{tpu_custom_call.1} parent=1 // pred_region
      %s11 = ssub.s32 128, 128
      %12 = vsyncadd [#allocation3], %s11
      %s14 = sshll.u32 [#allocation2], 4
      %s15 = int_to_ptr.vmem [resolvable:$true] %s14
      %17 = dma.hbm_to_vmem [thread:$0]  %s0, 128, %s15, [#allocation3]
    $region5: #{tpu_custom_call.1} parent=1 // pred_fallthru
      _
    // Predicated region
    $region6: #{tpu_custom_call.1} parent=1 // pred_check
      _
    $region7: #{tpu_custom_call.1} parent=1 // pred_check_branch
      %19 = sbr.rel (0) target = $region9
    $region8: #{tpu_custom_call.1} parent=1 // pred_region
      %20 = dma.done [#allocation3], 128
    $region9: #{tpu_custom_call.1} parent=1 // pred_fallthru
      _
    %v21 = vld [vmem:[#allocation2] sm:$0xff]
    %v22 = vmul.f32 %v21, %v21
    %vm23 = vcmask 261120
    %v24 = vsel %vm23, %v22, 0.0
    %25 = vadd.xlane.f32.xlu0 %v24
    %v26 = vpop.xlane.xlu0 %25
    %v27 = vmax.f32 %v26, 1e-24
    %v28 = vrsqrt.pop %v27
    %v29 = vmul.f32 %v21, %v28
    %v30 = vpack.c.bf16 %v29, %v29
    %vm31 = vcmask 257024
    %32 = vst.msk [vmem:[#allocation5] sm:$0xf] %vm31, %v30
    // Predicated region
    $region10: #{tpu_custom_call.1} parent=1 // pred_check
      _
    $region11: #{tpu_custom_call.1} parent=1 // pred_check_branch
      %34 = sbr.rel (0) target = $region13
    $region12: #{tpu_custom_call.1} parent=1 // pred_region
      %s36 = ssub.s32 64, 64
      %37 = vsyncadd [#allocation4], %s36
      %s39 = sshll.u32 [#allocation5], 4
      %s40 = int_to_ptr.vmem [resolvable:$true] %s39
      %42 = dma.vmem_to_hbm [thread:$0]  %s40, 64, %s1, [#allocation4]
    $region13: #{tpu_custom_call.1} parent=1 // pred_fallthru
      _
    // Predicated region
    $region14: #{tpu_custom_call.1} parent=1 // pred_check
      _
    $region15: #{tpu_custom_call.1} parent=1 // pred_check_branch
      %44 = sbr.rel (0) target = $region17
    $region16: #{tpu_custom_call.1} parent=1 // pred_region
      %45 = dma.done [#allocation4], 64
    $region17: #{tpu_custom_call.1} parent=1 // pred_fallthru
      _
    %46 = vsyncpa [#allocation3], 1
    %47 = vsyncpa [#allocation4], 1

</llo_original>
